<compile_context>
chip_gen: v5e
topology: v5e:2x2
jax: 0.10.0
libtpu: 0.0.40
codegen_flags: <defaults>
</compile_context>

<pallas_src>
import jax
import jax.numpy as jnp
from jax.experimental import pallas as pl
from jax.experimental.pallas import tpu as pltpu


# ----------------------------- Pallas kernel ------------------------------ #

def _cam_pose_encoder_kernel(view_idx_ref,            # scalar-prefetch (SMEM)
                             x_ref, w1_ref, b1_ref,   # inputs (VMEM)
                             w2_ref, b2_ref,
                             wv_ref, bv_ref,
                             o_ref):                  # output (VMEM)
    del view_idx_ref  # only used by the BlockSpec index_maps
    # spatial_encoder: Linear -> ReLU -> Linear -> ReLU
    x = x_ref[...].astype(jnp.bfloat16)                               # (TB, in_pad)
    h = jnp.dot(x, w1_ref[...], preferred_element_type=jnp.float32) + b1_ref[...]
    h = jnp.maximum(h, 0.0).astype(jnp.bfloat16)
    h = jnp.dot(h, w2_ref[...], preferred_element_type=jnp.float32) + b2_ref[...]
    h = jnp.maximum(h, 0.0).astype(jnp.bfloat16)

    # view_transforms[view_idx]: the BlockSpec index_map already selected the
    # right slice of the stacked (num_views, H, O) weights via scalar prefetch.
    z = jnp.dot(h, wv_ref[...], preferred_element_type=jnp.float32) + bv_ref[...]

    # sigmoid(z) == 0.5 * tanh(0.5 * z) + 0.5  -> one EUP push, no select/abs.
    o_ref[...] = (jnp.tanh(z * 0.5) * 0.5 + 0.5).astype(o_ref.dtype)


# ------------------------------- wrapper ----------------------------------- #

def _round_up(x, m):
    return ((x + m - 1) // m) * m


# Only split a single-tile batch into >=2 parallel tiles (for v7x's 2 TCs)
# when each half still has at least this many rows.
_MIN_SPLIT_ROWS = 512


def cam_pose_encoder_forward(cam_params, view_idx, prepared, *,
                             max_row_tile=2048,
                             out_dtype=jnp.bfloat16,
                             single_buffer_weights=True):
    """cam_params: (B, input_dim) f32; view_idx: scalar int; prepared params."""
    w1, b1, w2, b2, wv, bv = (prepared["w1"], prepared["b1"], prepared["w2"],
                              prepared["b2"], prepared["wv"], prepared["bv"])
    B, in_dim = cam_params.shape
    in_pad, hidden = w1.shape
    num_views, _, out_dim = wv.shape

    # zero-pad the feature axis (e.g. 5 -> 16) to match the padded w1 rows.
    if in_dim < in_pad:
        cam_params = jnp.pad(cam_params, ((0, 0), (0, in_pad - in_dim)))

    # --- batch tiling -------------------------------------------------------
    max_row_tile = max(8, _round_up(max_row_tile, 8))
    b_pad8 = _round_up(B, 8)
    if b_pad8 <= max_row_tile:
        if b_pad8 >= 2 * _MIN_SPLIT_ROWS:
            # Large single-tile batch: make >=2 parallel tiles so both v7x
            # TensorCores get work.  No-op cost on 1-TC v5e/v6e.
            tb = _round_up(pl.cdiv(b_pad8, 2), 8)
        else:
            tb = b_pad8
    else:
        tb = max_row_tile
    b_pad = _round_up(b_pad8, tb)
    if b_pad != B:
        cam_params = jnp.pad(cam_params, ((0, b_pad - B), (0, 0)))
    n_tiles = b_pad // tb

    # bounds-check view_idx: clamp so a bad index can't drive the index_map OOB.
    view_idx = jnp.clip(jnp.asarray(view_idx, jnp.int32),
                        0, num_views - 1).reshape((1,))

    # --- cost estimate ------------------------------------------------------
    out_bytes = jnp.dtype(out_dtype).itemsize
    flops = 2 * b_pad * (in_pad * hidden + hidden * hidden + hidden * out_dim)
    bytes_accessed = (b_pad * in_pad * 4                          # x (f32)
                      + (in_pad * hidden + hidden * hidden
                         + hidden * out_dim) * 2                  # bf16 weights
                      + (2 * hidden + out_dim) * 4                # f32 biases
                      + b_pad * out_dim * out_bytes)              # output
    cost = pl.CostEstimate(flops=flops,
                           transcendentals=b_pad * out_dim,       # one tanh/elem
                           bytes_accessed=bytes_accessed)

    def _run(use_single_buffer):
        # Constant index_maps -> weight blocks are fetched once and stay
        # resident; single-buffer them to avoid reserving 2x VMEM.
        wmode = ({"pipeline_mode": pl.Buffered(1)}
                 if use_single_buffer else {})
        grid_spec = pltpu.PrefetchScalarGridSpec(
            num_scalar_prefetch=1,
            grid=(n_tiles,),
            in_specs=[
                pl.BlockSpec((tb, in_pad),     lambda i, vidx: (i, 0)),
                pl.BlockSpec((in_pad, hidden), lambda i, vidx: (0, 0), **wmode),
                pl.BlockSpec((1, hidden),      lambda i, vidx: (0, 0), **wmode),
                pl.BlockSpec((hidden, hidden), lambda i, vidx: (0, 0), **wmode),
                pl.BlockSpec((1, hidden),      lambda i, vidx: (0, 0), **wmode),
                # stacked per-view weights: pick block vidx[0] along axis 0
                pl.BlockSpec((None, hidden, out_dim),
                             lambda i, vidx: (vidx[0], 0, 0), **wmode),
                pl.BlockSpec((None, 1, out_dim),
                             lambda i, vidx: (vidx[0], 0, 0), **wmode),
            ],
            out_specs=pl.BlockSpec((tb, out_dim), lambda i, vidx: (i, 0)),
        )
        out = pl.pallas_call(
            _cam_pose_encoder_kernel,
            out_shape=jax.ShapeDtypeStruct((b_pad, out_dim), out_dtype),
            grid_spec=grid_spec,
            compiler_params=pltpu.CompilerParams(
                dimension_semantics=("parallel",),
                vmem_limit_bytes=32 * 1024 * 1024),
            cost_estimate=cost,
        )(view_idx, cam_params, w1, b1, w2, b2, wv, bv)
        return jax.block_until_ready(out)

    if single_buffer_weights:
        try:
            out = _run(True)
        except Exception:
            # pipeline_mode=pl.Buffered(1) unsupported on this jax build:
            # fall back to default double-buffering (only ~100 KB extra VMEM).
            out = _run(False)
    else:
        out = _run(False)

    return out[:B]


# --------------------------- parameter creation ---------------------------- #

def _xavier_uniform(key, fan_in, fan_out):
    bound = (6.0 / (fan_in + fan_out)) ** 0.5
    # stored as (in, out) so the kernel computes x @ W
    return jax.random.uniform(key, (fan_in, fan_out), jnp.float32, -bound, bound)


def init_params(key, input_dim=5, hidden_dim=128, output_dim=256, num_views=4):
    ks = jax.random.split(key, 2 + num_views)
    w1 = _xavier_uniform(ks[0], input_dim, hidden_dim)
    w2 = _xavier_uniform(ks[1], hidden_dim, hidden_dim)
    wv = jnp.stack([_xavier_uniform(ks[2 + v], hidden_dim, output_dim)
                    for v in range(num_views)], axis=0)          # (V, H, O)
    return {
        "w1": w1,
        "b1": jnp.zeros((1, hidden_dim), jnp.float32),
        "w2": w2,
        "b2": jnp.zeros((1, hidden_dim), jnp.float32),
        "wv": wv,
        "bv": jnp.zeros((num_views, 1, output_dim), jnp.float32),  # (V, 1, O)
    }


def prepare_params(params):
    """Pad w1's input dim to a multiple of 16 (bf16 sublane tile) and cast
    weights to bf16; biases stay f32 (accumulation is f32 in-kernel)."""
    w1 = params["w1"]
    in_dim = w1.shape[0]
    in_pad = _round_up(in_dim, 16)
    if in_dim < in_pad:
        w1 = jnp.pad(w1, ((0, in_pad - in_dim), (0, 0)))
    return {
        "w1": w1.astype(jnp.bfloat16),
        "b1": params["b1"].astype(jnp.float32),
        "w2": params["w2"].astype(jnp.bfloat16),
        "b2": params["b2"].astype(jnp.float32),
        "wv": params["wv"].astype(jnp.bfloat16),
        "bv": params["bv"].astype(jnp.float32),
    }


# ------------------------------ reference ---------------------------------- #

def reference_forward(cam_params, view_idx, prepared):
    """Pure-JAX reference following the same bf16-weight numeric path (f32 out)."""
    in_pad = prepared["w1"].shape[0]
    x = jnp.pad(cam_params, ((0, 0), (0, in_pad - cam_params.shape[1])))
    x = x.astype(jnp.bfloat16).astype(jnp.float32)
    w1 = prepared["w1"].astype(jnp.float32)
    w2 = prepared["w2"].astype(jnp.float32)
    wv = prepared["wv"][view_idx].astype(jnp.float32)
    h = jnp.maximum(x @ w1 + prepared["b1"], 0.0)
    h = h.astype(jnp.bfloat16).astype(jnp.float32)
    h = jnp.maximum(h @ w2 + prepared["b2"], 0.0)
    h = h.astype(jnp.bfloat16).astype(jnp.float32)
    z = h @ wv + prepared["bv"][view_idx]
    return jax.nn.sigmoid(z)


# --------------------------------- main ------------------------------------ #

if __name__ == "__main__":
    key = jax.random.PRNGKey(0)
    k_param, k_x = jax.random.split(key)

    B, input_dim, hidden_dim, output_dim, num_views = 8, 5, 128, 256, 4
    params = init_params(k_param, input_dim, hidden_dim, output_dim, num_views)
    prepared = prepare_params(params)

    cam_params = jax.random.normal(k_x, (B, input_dim), jnp.float32)
    view_idx = 2

    out = cam_pose_encoder_forward(cam_params, view_idx, prepared)
    out = jax.block_until_ready(out)

    ref = reference_forward(cam_params, view_idx, prepared)
    assert out.shape == (B, output_dim)
    # bf16 weights + bf16 output + EUP tanh => small absolute tolerance
    err = jnp.max(jnp.abs(out.astype(jnp.float32) - ref))
    assert err < 1e-2, f"max abs error {err}"

    print("KERNEL_OK")
</pallas_src>

<mosaic_0001>
module attributes {stable_mosaic.version = 11 : i64} {
  func.func @_cam_pose_encoder_kernel(%arg0: i32, %arg1: memref<1xi32, #tpu.memory_space<smem>>, %arg2: memref<8x16xf32, #tpu.memory_space<vmem>>, %arg3: memref<16x128xbf16, #tpu.memory_space<vmem>>, %arg4: memref<1x128xf32, #tpu.memory_space<vmem>>, %arg5: memref<128x128xbf16, #tpu.memory_space<vmem>>, %arg6: memref<1x128xf32, #tpu.memory_space<vmem>>, %arg7: memref<1x128x256xbf16, #tpu.memory_space<vmem>>, %arg8: memref<1x1x256xf32, #tpu.memory_space<vmem>>, %arg9: memref<8x256xbf16, #tpu.memory_space<vmem>>) attributes {dimension_semantics = [#tpu.dimension_semantics<parallel>], iteration_bounds = array<i64: 1>, scalar_prefetch = 1 : i64, scratch_operands = 0 : i64, tpu.core_type = #tpu.core_type<tc>, window_params = [{transform_indices = @transform_0, window_bounds = array<i64: 8, 16>}, {pipeline_mode = #tpu.pipeline_mode<synchronous>, transform_indices = @transform_1, window_bounds = array<i64: 16, 128>}, {pipeline_mode = #tpu.pipeline_mode<synchronous>, transform_indices = @transform_2, window_bounds = array<i64: 1, 128>}, {pipeline_mode = #tpu.pipeline_mode<synchronous>, transform_indices = @transform_3, window_bounds = array<i64: 128, 128>}, {pipeline_mode = #tpu.pipeline_mode<synchronous>, transform_indices = @transform_4, window_bounds = array<i64: 1, 128>}, {pipeline_mode = #tpu.pipeline_mode<synchronous>, transform_indices = @transform_5, window_bounds = array<i64: 1, 128, 256>}, {pipeline_mode = #tpu.pipeline_mode<synchronous>, transform_indices = @transform_6, window_bounds = array<i64: 1, 1, 256>}, {transform_indices = @transform_7, window_bounds = array<i64: 8, 256>}]} {
    %c0 = arith.constant 0 : index
    %c0_0 = arith.constant 0 : index
    %0 = vector.load %arg2[%c0, %c0_0] : memref<8x16xf32, #tpu.memory_space<vmem>>, vector<8x16xf32>
    %1 = arith.truncf %0 : vector<8x16xf32> to vector<8x16xbf16>
    %c0_1 = arith.constant 0 : index
    %c0_2 = arith.constant 0 : index
    %2 = vector.load %arg3[%c0_1, %c0_2] : memref<16x128xbf16, #tpu.memory_space<vmem>>, vector<16x128xbf16>
    %cst = arith.constant dense<0.000000e+00> : vector<8x128xf32>
    %3 = tpu.matmul %1, %2, %cst {dimension_numbers = #tpu.dot_dimension_numbers<[1], [0], [0], [1], [0, 0, 1, 1], [], []>} : vector<8x16xbf16>, vector<16x128xbf16>, vector<8x128xf32> -> vector<8x128xf32>
    %c0_3 = arith.constant 0 : index
    %c0_4 = arith.constant 0 : index
    %4 = vector.load %arg4[%c0_3, %c0_4] : memref<1x128xf32, #tpu.memory_space<vmem>>, vector<1x128xf32>
    %5 = vector.broadcast %4 : vector<1x128xf32> to vector<8x128xf32>
    %6 = arith.addf %3, %5 : vector<8x128xf32>
    %cst_5 = arith.constant 0.000000e+00 : f32
    %7 = vector.broadcast %cst_5 : f32 to vector<8x128xf32>
    %8 = arith.maximumf %6, %7 : vector<8x128xf32>
    %9 = arith.truncf %8 : vector<8x128xf32> to vector<8x128xbf16>
    %c0_6 = arith.constant 0 : index
    %c0_7 = arith.constant 0 : index
    %10 = vector.load %arg5[%c0_6, %c0_7] : memref<128x128xbf16, #tpu.memory_space<vmem>>, vector<128x128xbf16>
    %cst_8 = arith.constant dense<0.000000e+00> : vector<8x128xf32>
    %11 = tpu.matmul %9, %10, %cst_8 {dimension_numbers = #tpu.dot_dimension_numbers<[1], [0], [0], [1], [0, 0, 1, 1], [], []>} : vector<8x128xbf16>, vector<128x128xbf16>, vector<8x128xf32> -> vector<8x128xf32>
    %c0_9 = arith.constant 0 : index
    %c0_10 = arith.constant 0 : index
    %12 = vector.load %arg6[%c0_9, %c0_10] : memref<1x128xf32, #tpu.memory_space<vmem>>, vector<1x128xf32>
    %13 = vector.broadcast %12 : vector<1x128xf32> to vector<8x128xf32>
    %14 = arith.addf %11, %13 : vector<8x128xf32>
    %cst_11 = arith.constant 0.000000e+00 : f32
    %15 = vector.broadcast %cst_11 : f32 to vector<8x128xf32>
    %16 = arith.maximumf %14, %15 : vector<8x128xf32>
    %17 = arith.truncf %16 : vector<8x128xf32> to vector<8x128xbf16>
    %c0_12 = arith.constant 0 : index
    %c0_13 = arith.constant 0 : index
    %c0_14 = arith.constant 0 : index
    %18 = vector.load %arg7[%c0_12, %c0_13, %c0_14] : memref<1x128x256xbf16, #tpu.memory_space<vmem>>, vector<1x128x256xbf16>
    %19 = vector.shape_cast %18 : vector<1x128x256xbf16> to vector<128x256xbf16>
    %cst_15 = arith.constant dense<0.000000e+00> : vector<8x256xf32>
    %20 = tpu.matmul %17, %19, %cst_15 {dimension_numbers = #tpu.dot_dimension_numbers<[1], [0], [0], [1], [0, 0, 1, 1], [], []>} : vector<8x128xbf16>, vector<128x256xbf16>, vector<8x256xf32> -> vector<8x256xf32>
    %c0_16 = arith.constant 0 : index
    %c0_17 = arith.constant 0 : index
    %c0_18 = arith.constant 0 : index
    %21 = vector.load %arg8[%c0_16, %c0_17, %c0_18] : memref<1x1x256xf32, #tpu.memory_space<vmem>>, vector<1x1x256xf32>
    %22 = vector.shape_cast %21 : vector<1x1x256xf32> to vector<1x256xf32>
    %23 = vector.broadcast %22 : vector<1x256xf32> to vector<8x256xf32>
    %24 = arith.addf %20, %23 : vector<8x256xf32>
    %cst_19 = arith.constant 5.000000e-01 : f32
    %25 = vector.broadcast %cst_19 : f32 to vector<8x256xf32>
    %26 = arith.mulf %24, %25 : vector<8x256xf32>
    %27 = math.tanh %26 : vector<8x256xf32>
    %cst_20 = arith.constant 5.000000e-01 : f32
    %28 = vector.broadcast %cst_20 : f32 to vector<8x256xf32>
    %29 = arith.mulf %27, %28 : vector<8x256xf32>
    %cst_21 = arith.constant 5.000000e-01 : f32
    %30 = vector.broadcast %cst_21 : f32 to vector<8x256xf32>
    %31 = arith.addf %29, %30 : vector<8x256xf32>
    %32 = arith.truncf %31 : vector<8x256xf32> to vector<8x256xbf16>
    %c0_22 = arith.constant 0 : index
    %c0_23 = arith.constant 0 : index
    %33 = vector.load %arg9[%c0_22, %c0_23] : memref<8x256xbf16, #tpu.memory_space<vmem>>, vector<8x256xbf16>
    tpu.vector_store %arg9[%c0_22, %c0_23], %32 {strides = array<i32>} : memref<8x256xbf16, #tpu.memory_space<vmem>>, vector<8x256xbf16>,
    return
  }
  func.func @transform_0(%arg0: i32, %arg1: memref<1xi32, #tpu.memory_space<smem>>) -> (i32, i32) {
    %c0_i32 = arith.constant 0 : i32
    %c0_i32_0 = arith.constant 0 : i32
    return %arg0, %c0_i32 : i32, i32
  }
  func.func @transform_1(%arg0: i32, %arg1: memref<1xi32, #tpu.memory_space<smem>>) -> (i32, i32) {
    %c0_i32 = arith.constant 0 : i32
    %c0_i32_0 = arith.constant 0 : i32
    %c0_i32_1 = arith.constant 0 : i32
    return %c0_i32, %c0_i32_0 : i32, i32
  }
  func.func @transform_2(%arg0: i32, %arg1: memref<1xi32, #tpu.memory_space<smem>>) -> (i32, i32) {
    %c0_i32 = arith.constant 0 : i32
    %c0_i32_0 = arith.constant 0 : i32
    %c0_i32_1 = arith.constant 0 : i32
    return %c0_i32, %c0_i32_0 : i32, i32
  }
  func.func @transform_3(%arg0: i32, %arg1: memref<1xi32, #tpu.memory_space<smem>>) -> (i32, i32) {
    %c0_i32 = arith.constant 0 : i32
    %c0_i32_0 = arith.constant 0 : i32
    %c0_i32_1 = arith.constant 0 : i32
    return %c0_i32, %c0_i32_0 : i32, i32
  }
  func.func @transform_4(%arg0: i32, %arg1: memref<1xi32, #tpu.memory_space<smem>>) -> (i32, i32) {
    %c0_i32 = arith.constant 0 : i32
    %c0_i32_0 = arith.constant 0 : i32
    %c0_i32_1 = arith.constant 0 : i32
    return %c0_i32, %c0_i32_0 : i32, i32
  }
  func.func @transform_5(%arg0: i32, %arg1: memref<1xi32, #tpu.memory_space<smem>>) -> (i32, i32, i32) {
    %c0 = arith.constant 0 : index
    %0 = memref.load %arg1[%c0] : memref<1xi32, #tpu.memory_space<smem>>
    %c0_i32 = arith.constant 0 : i32
    %c0_i32_0 = arith.constant 0 : i32
    %c0_i32_1 = arith.constant 0 : i32
    return %0, %c0_i32, %c0_i32_0 : i32, i32, i32
  }
  func.func @transform_6(%arg0: i32, %arg1: memref<1xi32, #tpu.memory_space<smem>>) -> (i32, i32, i32) {
    %c0 = arith.constant 0 : index
    %0 = memref.load %arg1[%c0] : memref<1xi32, #tpu.memory_space<smem>>
    %c0_i32 = arith.constant 0 : i32
    %c0_i32_0 = arith.constant 0 : i32
    %c0_i32_1 = arith.constant 0 : i32
    return %0, %c0_i32, %c0_i32_0 : i32, i32, i32
  }
  func.func @transform_7(%arg0: i32, %arg1: memref<1xi32, #tpu.memory_space<smem>>) -> (i32, i32) {
    %c0_i32 = arith.constant 0 : i32
    %c0_i32_0 = arith.constant 0 : i32
    return %arg0, %c0_i32 : i32, i32
  }
}

module attributes {stable_mosaic.version = 11 : i64} {
  func.func @_cam_pose_encoder_kernel(%arg0: i32, %arg1: memref<1xi32, #tpu.memory_space<smem>>, %arg2: memref<8x16xf32, #tpu.memory_space<vmem>>, %arg3: memref<16x128xbf16, #tpu.memory_space<vmem>>, %arg4: memref<1x128xf32, #tpu.memory_space<vmem>>, %arg5: memref<128x128xbf16, #tpu.memory_space<vmem>>, %arg6: memref<1x128xf32, #tpu.memory_space<vmem>>, %arg7: memref<1x128x256xbf16, #tpu.memory_space<vmem>>, %arg8: memref<1x1x256xf32, #tpu.memory_space<vmem>>, %arg9: memref<8x256xbf16, #tpu.memory_space<vmem>>) attributes {dimension_semantics = [#tpu.dimension_semantics<parallel>], iteration_bounds = array<i64: 1>, scalar_prefetch = 1 : i64, scratch_operands = 0 : i64, tpu.core_type = #tpu.core_type<tc>, window_params = [{transform_indices = @transform_0, window_bounds = array<i64: 8, 16>}, {pipeline_mode = #tpu.pipeline_mode<synchronous>, transform_indices = @transform_1, window_bounds = array<i64: 16, 128>}, {pipeline_mode = #tpu.pipeline_mode<synchronous>, transform_indices = @transform_2, window_bounds = array<i64: 1, 128>}, {pipeline_mode = #tpu.pipeline_mode<synchronous>, transform_indices = @transform_3, window_bounds = array<i64: 128, 128>}, {pipeline_mode = #tpu.pipeline_mode<synchronous>, transform_indices = @transform_4, window_bounds = array<i64: 1, 128>}, {transform_indices = @transform_5, window_bounds = array<i64: 1, 128, 256>}, {transform_indices = @transform_6, window_bounds = array<i64: 1, 1, 256>}, {transform_indices = @transform_7, window_bounds = array<i64: 8, 256>}]} {
    %c0 = arith.constant 0 : index
    %c0_0 = arith.constant 0 : index
    %0 = vector.load %arg2[%c0, %c0_0] : memref<8x16xf32, #tpu.memory_space<vmem>>, vector<8x16xf32>
    %1 = arith.truncf %0 : vector<8x16xf32> to vector<8x16xbf16>
    %c0_1 = arith.constant 0 : index
    %c0_2 = arith.constant 0 : index
    %2 = vector.load %arg3[%c0_1, %c0_2] : memref<16x128xbf16, #tpu.memory_space<vmem>>, vector<16x128xbf16>
    %cst = arith.constant dense<0.000000e+00> : vector<8x128xf32>
    %3 = tpu.matmul %1, %2, %cst {dimension_numbers = #tpu.dot_dimension_numbers<[1], [0], [0], [1], [0, 0, 1, 1], [], []>} : vector<8x16xbf16>, vector<16x128xbf16>, vector<8x128xf32> -> vector<8x128xf32>
    %c0_3 = arith.constant 0 : index
    %c0_4 = arith.constant 0 : index
    %4 = vector.load %arg4[%c0_3, %c0_4] : memref<1x128xf32, #tpu.memory_space<vmem>>, vector<1x128xf32>
    %5 = vector.broadcast %4 : vector<1x128xf32> to vector<8x128xf32>
    %6 = arith.addf %3, %5 : vector<8x128xf32>
    %cst_5 = arith.constant 0.000000e+00 : f32
    %7 = vector.broadcast %cst_5 : f32 to vector<8x128xf32>
    %8 = arith.maximumf %6, %7 : vector<8x128xf32>
    %9 = arith.truncf %8 : vector<8x128xf32> to vector<8x128xbf16>
    %c0_6 = arith.constant 0 : index
    %c0_7 = arith.constant 0 : index
    %10 = vector.load %arg5[%c0_6, %c0_7] : memref<128x128xbf16, #tpu.memory_space<vmem>>, vector<128x128xbf16>
    %cst_8 = arith.constant dense<0.000000e+00> : vector<8x128xf32>
    %11 = tpu.matmul %9, %10, %cst_8 {dimension_numbers = #tpu.dot_dimension_numbers<[1], [0], [0], [1], [0, 0, 1, 1], [], []>} : vector<8x128xbf16>, vector<128x128xbf16>, vector<8x128xf32> -> vector<8x128xf32>
    %c0_9 = arith.constant 0 : index
    %c0_10 = arith.constant 0 : index
    %12 = vector.load %arg6[%c0_9, %c0_10] : memref<1x128xf32, #tpu.memory_space<vmem>>, vector<1x128xf32>
    %13 = vector.broadcast %12 : vector<1x128xf32> to vector<8x128xf32>
    %14 = arith.addf %11, %13 : vector<8x128xf32>
    %cst_11 = arith.constant 0.000000e+00 : f32
    %15 = vector.broadcast %cst_11 : f32 to vector<8x128xf32>
    %16 = arith.maximumf %14, %15 : vector<8x128xf32>
    %17 = arith.truncf %16 : vector<8x128xf32> to vector<8x128xbf16>
    %c0_12 = arith.constant 0 : index
    %c0_13 = arith.constant 0 : index
    %c0_14 = arith.constant 0 : index
    %18 = vector.load %arg7[%c0_12, %c0_13, %c0_14] : memref<1x128x256xbf16, #tpu.memory_space<vmem>>, vector<1x128x256xbf16>
    %19 = vector.shape_cast %18 : vector<1x128x256xbf16> to vector<128x256xbf16>
    %cst_15 = arith.constant dense<0.000000e+00> : vector<8x256xf32>
    %20 = tpu.matmul %17, %19, %cst_15 {dimension_numbers = #tpu.dot_dimension_numbers<[1], [0], [0], [1], [0, 0, 1, 1], [], []>} : vector<8x128xbf16>, vector<128x256xbf16>, vector<8x256xf32> -> vector<8x256xf32>
    %c0_16 = arith.constant 0 : index
    %c0_17 = arith.constant 0 : index
    %c0_18 = arith.constant 0 : index
    %21 = vector.load %arg8[%c0_16, %c0_17, %c0_18] : memref<1x1x256xf32, #tpu.memory_space<vmem>>, vector<1x1x256xf32>
    %22 = vector.shape_cast %21 : vector<1x1x256xf32> to vector<1x256xf32>
    %23 = vector.broadcast %22 : vector<1x256xf32> to vector<8x256xf32>
    %24 = arith.addf %20, %23 : vector<8x256xf32>
    %cst_19 = arith.constant 5.000000e-01 : f32
    %25 = vector.broadcast %cst_19 : f32 to vector<8x256xf32>
    %26 = arith.mulf %24, %25 : vector<8x256xf32>
    %27 = math.tanh %26 : vector<8x256xf32>
    %cst_20 = arith.constant 5.000000e-01 : f32
    %28 = vector.broadcast %cst_20 : f32 to vector<8x256xf32>
    %29 = arith.mulf %27, %28 : vector<8x256xf32>
    %cst_21 = arith.constant 5.000000e-01 : f32
    %30 = vector.broadcast %cst_21 : f32 to vector<8x256xf32>
    %31 = arith.addf %29, %30 : vector<8x256xf32>
    %32 = arith.truncf %31 : vector<8x256xf32> to vector<8x256xbf16>
    %c0_22 = arith.constant 0 : index
    %c0_23 = arith.constant 0 : index
    %33 = vector.load %arg9[%c0_22, %c0_23] : memref<8x256xbf16, #tpu.memory_space<vmem>>, vector<8x256xbf16>
    tpu.vector_store %arg9[%c0_22, %c0_23], %32 {strides = array<i32>} : memref<8x256xbf16, #tpu.memory_space<vmem>>, vector<8x256xbf16>,
    return
  }
  func.func @transform_0(%arg0: i32, %arg1: memref<1xi32, #tpu.memory_space<smem>>) -> (i32, i32) {
    %c0_i32 = arith.constant 0 : i32
    %c0_i32_0 = arith.constant 0 : i32
    return %arg0, %c0_i32 : i32, i32
  }
  func.func @transform_1(%arg0: i32, %arg1: memref<1xi32, #tpu.memory_space<smem>>) -> (i32, i32) {
    %c0_i32 = arith.constant 0 : i32
    %c0_i32_0 = arith.constant 0 : i32
    %c0_i32_1 = arith.constant 0 : i32
    return %c0_i32, %c0_i32_0 : i32, i32
  }
  func.func @transform_2(%arg0: i32, %arg1: memref<1xi32, #tpu.memory_space<smem>>) -> (i32, i32) {
    %c0_i32 = arith.constant 0 : i32
    %c0_i32_0 = arith.constant 0 : i32
    %c0_i32_1 = arith.constant 0 : i32
    return %c0_i32, %c0_i32_0 : i32, i32
  }
  func.func @transform_3(%arg0: i32, %arg1: memref<1xi32, #tpu.memory_space<smem>>) -> (i32, i32) {
    %c0_i32 = arith.constant 0 : i32
    %c0_i32_0 = arith.constant 0 : i32
    %c0_i32_1 = arith.constant 0 : i32
    return %c0_i32, %c0_i32_0 : i32, i32
  }
  func.func @transform_4(%arg0: i32, %arg1: memref<1xi32, #tpu.memory_space<smem>>) -> (i32, i32) {
    %c0_i32 = arith.constant 0 : i32
    %c0_i32_0 = arith.constant 0 : i32
    %c0_i32_1 = arith.constant 0 : i32
    return %c0_i32, %c0_i32_0 : i32, i32
  }
  func.func @transform_5(%arg0: i32, %arg1: memref<1xi32, #tpu.memory_space<smem>>) -> (i32, i32, i32) {
    %c0 = arith.constant 0 : index
    %0 = memref.load %arg1[%c0] : memref<1xi32, #tpu.memory_space<smem>>
    %c0_i32 = arith.constant 0 : i32
    %c0_i32_0 = arith.constant 0 : i32
    %c0_i32_1 = arith.constant 0 : i32
    return %0, %c0_i32, %c0_i32_0 : i32, i32, i32
  }
  func.func @transform_6(%arg0: i32, %arg1: memref<1xi32, #tpu.memory_space<smem>>) -> (i32, i32, i32) {
    %c0 = arith.constant 0 : index
    %0 = memref.load %arg1[%c0] : memref<1xi32, #tpu.memory_space<smem>>
    %c0_i32 = arith.constant 0 : i32
    %c0_i32_0 = arith.constant 0 : i32
    %c0_i32_1 = arith.constant 0 : i32
    return %0, %c0_i32, %c0_i32_0 : i32, i32, i32
  }
  func.func @transform_7(%arg0: i32, %arg1: memref<1xi32, #tpu.memory_space<smem>>) -> (i32, i32) {
    %c0_i32 = arith.constant 0 : i32
    %c0_i32_0 = arith.constant 0 : i32
    return %arg0, %c0_i32 : i32, i32
  }
}

</mosaic_0001>

<llo_original>
// kernel: tpu_custom_call.1
$region0: #{tpu_custom_call.1}
  #allocation0 [shape = 'u32[]', space=smem, size = 0x4, offset = 0x4, fixed_abs, tag = 'smem constant byte address 0x4 - core index']
  #allocation1 [shape = 'u32[72,128]{1,0:T(1,128)}', space=vmem, size = 0x9000, scoped, tag = 'internal scratch']
  #allocation2 [shape = 's32[1]{0}', space=sflag, size = 0x4, scoped, tag = 'scoped memory for tpu_custom_call.1']
  #allocation3 [shape = 's32[1]{0:T(128)S(6)}', space=smem, size = 0x200, scoped, tag = 'prefetched SMEM operand 0']
  %s0 = inlined_call_operand.<no memory space> [shape: s32[1], index: 0, kind: input, shape index: {}]
  %s1 = inlined_call_operand.hbm [shape: f32[8,16], index: 1, kind: input, shape index: {}]
  %s2 = inlined_call_operand.hbm [shape: bf16[16,128], index: 2, kind: input, shape index: {}]
  %s3 = inlined_call_operand.vmem [shape: f32[1,128], index: 3, kind: input, shape index: {}]
  %s4 = inlined_call_operand.hbm [shape: bf16[128,128], index: 4, kind: input, shape index: {}]
  %s5 = inlined_call_operand.vmem [shape: f32[1,128], index: 5, kind: input, shape index: {}]
  %s6 = inlined_call_operand.hbm [shape: bf16[4,128,256], index: 6, kind: input, shape index: {}]
  %s7 = inlined_call_operand.hbm [shape: f32[4,1,256], index: 7, kind: input, shape index: {}]
  %s8 = inlined_call_operand.hbm [shape: bf16[8,256], index: 8, kind: output, shape index: {}]
  %s9 = sld [smem:[#allocation0]]
  $region58: #{tpu_custom_call.1} parent=0
    _
  %s11 = ssub.s32 1, %s9
  %s12 = scalar_select 0, %s11, %s9
  %13 = sst [smem:[#allocation3]] %s0
  $region1: #{tpu_custom_call.1} parent=0
    #allocation4 [shape = 'u8[4096]{0}', space=vmem, size = 0x1000, scoped, tag = 'input window, operand 1, single buffered']
    #allocation5 [shape = 's32[1]{0}', space=sflag, size = 0x4, scoped, tag = 'scoped memory for tpu_custom_call.1']
    #allocation6 [shape = 's32[1]{0}', space=sflag, size = 0x4, scoped, tag = 'scoped memory for tpu_custom_call.1']
    #allocation7 [shape = 'u8[4096]{0}', space=vmem, size = 0x1000, scoped, tag = 'input window, operand 2, single buffered']
    #allocation8 [shape = 's32[1]{0}', space=sflag, size = 0x4, scoped, tag = 'scoped memory for tpu_custom_call.1']
    #allocation9 [shape = 'u8[32768]{0}', space=vmem, size = 0x8000, scoped, tag = 'input window, operand 4, single buffered']
    #allocation10 [shape = 'u8[65536]{0}', space=vmem, size = 0x10000, scoped, tag = 'input window, operand 6, single buffered']
    #allocation11 [shape = 's32[1]{0}', space=sflag, size = 0x4, scoped, tag = 'scoped memory for tpu_custom_call.1']
    #allocation12 [shape = 'u8[1024]{0}', space=vmem, size = 0x400, scoped, tag = 'input window, operand 7, single buffered']
    #allocation13 [shape = 'u8[4096]{0}', space=vmem, size = 0x1000, scoped, tag = 'output window, operand 0, single buffered']
    %14 = vsyncpa [#allocation5], 0
    %15 = vsyncpa [#allocation8], 0
    %16 = vsyncpa [#allocation11], 0
    %17 = vsyncpa [#allocation6], 0
    // Predicated region
    $region2: #{tpu_custom_call.1} parent=1 // pred_check
      _
    $region3: #{tpu_custom_call.1} parent=1 // pred_check_branch
      %19 = sbr.rel (0) target = $region5
    $region4: #{tpu_custom_call.1} parent=1 // pred_region
      %21 = vsyncadd [#allocation5], 0
      %s23 = sshll.u32 %s1, 4
      %s24 = int_to_ptr.hbm [resolvable:$true] %s23
      %s25 = sshll.u32 [#allocation4], 4
      %s26 = int_to_ptr.vmem [resolvable:$true] %s25
      %28 = dma.hbm_to_vmem [thread:$0]  %s24, 128, %s26, [#allocation5]
    $region5: #{tpu_custom_call.1} parent=1 // pred_fallthru
      _
    // Predicated region
    $region6: #{tpu_custom_call.1} parent=1 // pred_check
      _
    $region7: #{tpu_custom_call.1} parent=1 // pred_check_branch
      %30 = sbr.rel (0) target = $region9
    $region8: #{tpu_custom_call.1} parent=1 // pred_region
      %32 = vsyncadd [#allocation8], 0
      %s33 = sshll.u32 %s2, 4
      %s34 = int_to_ptr.hbm [resolvable:$true] %s33
      %s35 = sshll.u32 [#allocation7], 4
      %s36 = int_to_ptr.vmem [resolvable:$true] %s35
      %41 = dma.hbm_to_vmem [thread:$0]  %s34, 128, %s36, [#allocation8], 64, 64, 4
    $region9: #{tpu_custom_call.1} parent=1 // pred_fallthru
      _
    // Predicated region
    $region10: #{tpu_custom_call.1} parent=1 // pred_check
      _
    $region11: #{tpu_custom_call.1} parent=1 // pred_check_branch
      %43 = sbr.rel (0) target = $region13
    $region12: #{tpu_custom_call.1} parent=1 // pred_region
      _
    $region13: #{tpu_custom_call.1} parent=1 // pred_fallthru
      _
    // Predicated region
    $region14: #{tpu_custom_call.1} parent=1 // pred_check
      _
    $region15: #{tpu_custom_call.1} parent=1 // pred_check_branch
      %45 = sbr.rel (0) target = $region17
    $region16: #{tpu_custom_call.1} parent=1 // pred_region
      %47 = vsyncadd [#allocation8], 0
      %s48 = sshll.u32 %s4, 4
      %s49 = int_to_ptr.hbm [resolvable:$true] %s48
      %s50 = sshll.u32 [#allocation9], 4
      %s51 = int_to_ptr.vmem [resolvable:$true] %s50
      %56 = dma.hbm_to_vmem [thread:$0]  %s49, 1024, %s51, [#allocation8], 64, 64, 4
    $region17: #{tpu_custom_call.1} parent=1 // pred_fallthru
      _
    // Predicated region
    $region18: #{tpu_custom_call.1} parent=1 // pred_check
      _
    $region19: #{tpu_custom_call.1} parent=1 // pred_check_branch
      %58 = sbr.rel (0) target = $region21
    $region20: #{tpu_custom_call.1} parent=1 // pred_region
      _
    $region21: #{tpu_custom_call.1} parent=1 // pred_fallthru
      _
    // Predicated region
    $region22: #{tpu_custom_call.1} parent=1 // pred_check
      _
    $region23: #{tpu_custom_call.1} parent=1 // pred_check_branch
      %60 = sbr.rel (0) target = $region25
    $region24: #{tpu_custom_call.1} parent=1 // pred_region
      %s61 = sld [smem:[#allocation3]]
      %63 = vsyncadd [#allocation11], 0
      %s64 = smul.addr %s61, 32
      %s65 = smul.addr %s64, 4
      %s66 = scalar_lea.hbm %s6, %s65
      %s67 = sshll.u32 %s66, 4
      %s68 = int_to_ptr.hbm [resolvable:$true] %s67
      %s69 = sshll.u32 [#allocation10], 4
      %s70 = int_to_ptr.vmem [resolvable:$true] %s69
      %75 = dma.hbm_to_vmem [thread:$0]  %s68, 2048, %s70, [#allocation11], 128, 128, 8
    $region25: #{tpu_custom_call.1} parent=1 // pred_fallthru
      _
    // Predicated region
    $region26: #{tpu_custom_call.1} parent=1 // pred_check
      _
    $region27: #{tpu_custom_call.1} parent=1 // pred_check_branch
      %77 = sbr.rel (0) target = $region29
    $region28: #{tpu_custom_call.1} parent=1 // pred_region
      %s78 = sld [smem:[#allocation3]]
      %80 = vsyncadd [#allocation11], 0
      %s81 = smul.addr %s78, 2
      %s82 = scalar_lea.hbm %s7, %s81
      %s84 = sshll.u32 %s82, 4
      %s85 = int_to_ptr.hbm [resolvable:$true] %s84
      %s86 = sshll.u32 [#allocation12], 4
      %s87 = int_to_ptr.vmem [resolvable:$true] %s86
      %89 = dma.hbm_to_vmem [thread:$0]  %s85, 32, %s87, [#allocation11]
    $region29: #{tpu_custom_call.1} parent=1 // pred_fallthru
      _
    // Predicated region
    $region30: #{tpu_custom_call.1} parent=1 // pred_check
      _
    $region31: #{tpu_custom_call.1} parent=1 // pred_check_branch
      %91 = sbr.rel (0) target = $region33
    $region32: #{tpu_custom_call.1} parent=1 // pred_region
      %93 = dma.done [#allocation5], 128
    $region33: #{tpu_custom_call.1} parent=1 // pred_fallthru
      _
    // Predicated region
    $region34: #{tpu_custom_call.1} parent=1 // pred_check
      _
    $region35: #{tpu_custom_call.1} parent=1 // pred_check_branch
      %95 = sbr.rel (0) target = $region37
    $region36: #{tpu_custom_call.1} parent=1 // pred_region
      %97 = dma.done [#allocation8], 128
    $region37: #{tpu_custom_call.1} parent=1 // pred_fallthru
      _
    // Predicated region
    $region38: #{tpu_custom_call.1} parent=1 // pred_check
      _
    $region39: #{tpu_custom_call.1} parent=1 // pred_check_branch
      %99 = sbr.rel (0) target = $region41
    $region40: #{tpu_custom_call.1} parent=1 // pred_region
      %101 = dma.done [#allocation8], 1024
    $region41: #{tpu_custom_call.1} parent=1 // pred_fallthru
      _
    // Predicated region
    $region42: #{tpu_custom_call.1} parent=1 // pred_check
      _
    $region43: #{tpu_custom_call.1} parent=1 // pred_check_branch
      %103 = sbr.rel (0) target = $region45
    $region44: #{tpu_custom_call.1} parent=1 // pred_region
      %105 = dma.done [#allocation11], 2048
    $region45: #{tpu_custom_call.1} parent=1 // pred_fallthru
      _
    // Predicated region
    $region46: #{tpu_custom_call.1} parent=1 // pred_check
      _
    $region47: #{tpu_custom_call.1} parent=1 // pred_check_branch
      %107 = sbr.rel (0) target = $region49
    $region48: #{tpu_custom_call.1} parent=1 // pred_region
      %109 = dma.done [#allocation11], 32
    $region49: #{tpu_custom_call.1} parent=1 // pred_fallthru
      _
    %s110 = sld [smem:[#allocation3]]
    %s111 = sld [smem:[#allocation3]]
    %v113 = vld [vmem:[#allocation4] sm:$0xff]
    %v114 = vpack.c.bf16 %v113, %v113
    %v115 = vld [vmem:[#allocation7] sm:$0xf]
    %v116 = vld [vmem:[#allocation7 + $0x4] sm:$0xf]
    %v117 = vld [vmem:[%s3] sm:$0x1]
    %v119 = vperm.slane %v117, 0
    %v123 = vunpack.c.l.b16 %v115
    %v124 = vunpack.c.l.b16 %v116
    %v125 = vpack.c.b16 %v124, %v123
    %vm127 = vcmask 130048
    %v129 = vsel %vm127, %v114, 0
    %131 = vmatpush.bf16.msra.mxu0 0
    %132 = vmatpush.bf16.msra.mxu0 0
    %133 = vmatpush.bf16.msra.mxu0 0
    %134 = vmatpush.bf16.msra.mxu0 0
    %135 = vmatpush.bf16.msra.mxu0 0
    %136 = vmatpush.bf16.msra.mxu0 0
    %137 = vmatpush.bf16.msra.mxu0 0
    %138 = vmatpush.bf16.msra.mxu0 %v125
    %139 = vmatmul.bf16.gmra.mxu0 %v129
    %v140 = vpop.f32.mrf.mxu0
    %v141 = vadd.f32 %v119, %v140
    %v142 = vpop.f32.mrf.mxu0
    %143 = vdwg.mxu0
    %v144 = vmax.f32 %v141, 0.0
    %v145 = vpack.c.bf16 %v144, %v144
    %v146 = vld [vmem:[#allocation9] sm:$0xf]
    %v147 = vld [vmem:[#allocation9 + $0x4] sm:$0xf]
    %v148 = vld [vmem:[#allocation9 + $0x8] sm:$0xf]
    %v149 = vld [vmem:[#allocation9 + $0xc] sm:$0xf]
    %v150 = vld [vmem:[#allocation9 + $0x10] sm:$0xf]
    %v151 = vld [vmem:[#allocation9 + $0x14] sm:$0xf]
    %v152 = vld [vmem:[#allocation9 + $0x18] sm:$0xf]
    %v153 = vld [vmem:[#allocation9 + $0x1c] sm:$0xf]
    %v154 = vld [vmem:[#allocation9 + $0x20] sm:$0xf]
    %v155 = vld [vmem:[#allocation9 + $0x24] sm:$0xf]
    %v156 = vld [vmem:[#allocation9 + $0x28] sm:$0xf]
    %v157 = vld [vmem:[#allocation9 + $0x2c] sm:$0xf]
    %v158 = vld [vmem:[#allocation9 + $0x30] sm:$0xf]
    %v159 = vld [vmem:[#allocation9 + $0x34] sm:$0xf]
    %v160 = vld [vmem:[#allocation9 + $0x38] sm:$0xf]
    %v161 = vld [vmem:[#allocation9 + $0x3c] sm:$0xf]
    %v162 = vld [vmem:[%s5] sm:$0x1]
    %v164 = vperm.slane %v162, 0
    %v182 = vunpack.c.l.b16 %v146
    %v183 = vunpack.c.l.b16 %v147
    %v184 = vunpack.c.l.b16 %v148
    %v185 = vunpack.c.l.b16 %v149
    %v186 = vunpack.c.l.b16 %v150
    %v187 = vunpack.c.l.b16 %v151
    %v188 = vunpack.c.l.b16 %v152
    %v189 = vunpack.c.l.b16 %v153
    %v190 = vunpack.c.l.b16 %v154
    %v191 = vunpack.c.l.b16 %v155
    %v192 = vunpack.c.l.b16 %v156
    %v193 = vunpack.c.l.b16 %v157
    %v194 = vunpack.c.l.b16 %v158
    %v195 = vunpack.c.l.b16 %v159
    %v196 = vunpack.c.l.b16 %v160
    %v197 = vunpack.c.l.b16 %v161
    %v198 = vpack.c.b16 %v183, %v182
    %v199 = vpack.c.b16 %v185, %v184
    %v200 = vpack.c.b16 %v187, %v186
    %v201 = vpack.c.b16 %v189, %v188
    %v202 = vpack.c.b16 %v191, %v190
    %v203 = vpack.c.b16 %v193, %v192
    %v204 = vpack.c.b16 %v195, %v194
    %v205 = vpack.c.b16 %v197, %v196
    %214 = vmatpush.bf16.msra.mxu0 %v205
    %215 = vmatpush.bf16.msra.mxu0 %v204
    %216 = vmatpush.bf16.msra.mxu0 %v203
    %217 = vmatpush.bf16.msra.mxu0 %v202
    %218 = vmatpush.bf16.msra.mxu0 %v201
    %219 = vmatpush.bf16.msra.mxu0 %v200
    %220 = vmatpush.bf16.msra.mxu0 %v199
    %221 = vmatpush.bf16.msra.mxu0 %v198
    %222 = vmatmul.bf16.gmra.mxu0 %v145
    %v223 = vpop.f32.mrf.mxu0
    %v224 = vadd.f32 %v164, %v223
    %v225 = vpop.f32.mrf.mxu0
    %226 = vdwg.mxu0
    %v227 = vmax.f32 %v224, 0.0
    %v228 = vpack.c.bf16 %v227, %v227
    %v229 = vld [vmem:[#allocation10] sm:$0xff]
    %v230 = vld [vmem:[#allocation10 + $0x8] sm:$0xff]
    %v231 = vld [vmem:[#allocation10 + $0x10] sm:$0xff]
    %v232 = vld [vmem:[#allocation10 + $0x18] sm:$0xff]
    %v233 = vld [vmem:[#allocation10 + $0x20] sm:$0xff]
    %v234 = vld [vmem:[#allocation10 + $0x28] sm:$0xff]
    %v235 = vld [vmem:[#allocation10 + $0x30] sm:$0xff]
    %v236 = vld [vmem:[#allocation10 + $0x38] sm:$0xff]
    %v237 = vld [vmem:[#allocation10 + $0x40] sm:$0xff]
    %v238 = vld [vmem:[#allocation10 + $0x48] sm:$0xff]
    %v239 = vld [vmem:[#allocation10 + $0x50] sm:$0xff]
    %v240 = vld [vmem:[#allocation10 + $0x58] sm:$0xff]
    %v241 = vld [vmem:[#allocation10 + $0x60] sm:$0xff]
    %v242 = vld [vmem:[#allocation10 + $0x68] sm:$0xff]
    %v243 = vld [vmem:[#allocation10 + $0x70] sm:$0xff]
    %v244 = vld [vmem:[#allocation10 + $0x78] sm:$0xff]
    %v245 = vld [vmem:[#allocation12] sm:$0x3]
    %v247 = vperm.slane %v245, 0
    %v248 = vperm.slane %v245, 1
    %v267 = vunpack.c.l.b16 %v229
    %v268 = vunpack.c.h.b16 %v229
    %v269 = vunpack.c.l.b16 %v230
    %v270 = vunpack.c.h.b16 %v230
    %v271 = vunpack.c.l.b16 %v231
    %v272 = vunpack.c.h.b16 %v231
    %v273 = vunpack.c.l.b16 %v232
    %v274 = vunpack.c.h.b16 %v232
    %v275 = vunpack.c.l.b16 %v233
    %v276 = vunpack.c.h.b16 %v233
    %v277 = vunpack.c.l.b16 %v234
    %v278 = vunpack.c.h.b16 %v234
    %v279 = vunpack.c.l.b16 %v235
    %v280 = vunpack.c.h.b16 %v235
    %v281 = vunpack.c.l.b16 %v236
    %v282 = vunpack.c.h.b16 %v236
    %v283 = vunpack.c.l.b16 %v237
    %v284 = vunpack.c.h.b16 %v237
    %v285 = vunpack.c.l.b16 %v238
    %v286 = vunpack.c.h.b16 %v238
    %v287 = vunpack.c.l.b16 %v239
    %v288 = vunpack.c.h.b16 %v239
    %v289 = vunpack.c.l.b16 %v240
    %v290 = vunpack.c.h.b16 %v240
    %v291 = vunpack.c.l.b16 %v241
    %v292 = vunpack.c.h.b16 %v241
    %v293 = vunpack.c.l.b16 %v242
    %v294 = vunpack.c.h.b16 %v242
    %v295 = vunpack.c.l.b16 %v243
    %v296 = vunpack.c.h.b16 %v243
    %v297 = vunpack.c.l.b16 %v244
    %v298 = vunpack.c.h.b16 %v244
    %v299 = vpack.c.b16 %v269, %v267
    %v300 = vpack.c.b16 %v270, %v268
    %v301 = vpack.c.b16 %v273, %v271
    %v302 = vpack.c.b16 %v274, %v272
    %v303 = vpack.c.b16 %v277, %v275
    %v304 = vpack.c.b16 %v278, %v276
    %v305 = vpack.c.b16 %v281, %v279
    %v306 = vpack.c.b16 %v282, %v280
    %v307 = vpack.c.b16 %v285, %v283
    %v308 = vpack.c.b16 %v286, %v284
    %v309 = vpack.c.b16 %v289, %v287
    %v310 = vpack.c.b16 %v290, %v288
    %v311 = vpack.c.b16 %v293, %v291
    %v312 = vpack.c.b16 %v294, %v292
    %v313 = vpack.c.b16 %v297, %v295
    %v314 = vpack.c.b16 %v298, %v296
    %331 = vmatpush.bf16.msra.mxu0 %v313
    %332 = vmatpush.bf16.msra.mxu0 %v311
    %333 = vmatpush.bf16.msra.mxu0 %v309
    %334 = vmatpush.bf16.msra.mxu0 %v307
    %335 = vmatpush.bf16.msra.mxu0 %v305
    %336 = vmatpush.bf16.msra.mxu0 %v303
    %337 = vmatpush.bf16.msra.mxu0 %v301
    %338 = vmatpush.bf16.msra.mxu0 %v299
    %339 = vmatmul.bf16.gmra.mxu0 %v228
    %v340 = vpop.f32.mrf.mxu0
    %v341 = vadd.f32 %v247, %v340
    %v342 = vpop.f32.mrf.mxu0
    %343 = vdwg.mxu0
    %344 = vmatpush.bf16.msra.mxu0 %v314
    %345 = vmatpush.bf16.msra.mxu0 %v312
    %346 = vmatpush.bf16.msra.mxu0 %v310
    %347 = vmatpush.bf16.msra.mxu0 %v308
    %348 = vmatpush.bf16.msra.mxu0 %v306
    %349 = vmatpush.bf16.msra.mxu0 %v304
    %350 = vmatpush.bf16.msra.mxu0 %v302
    %351 = vmatpush.bf16.msra.mxu0 %v300
    %352 = vmatmul.bf16.gmra.mxu0 %v228
    %v353 = vpop.f32.mrf.mxu0
    %v354 = vadd.f32 %v248, %v353
    %v355 = vpop.f32.mrf.mxu0
    %356 = vdwg.mxu0
    %v357 = vmul.f32 %v341, 0.5
    %v358 = vmul.f32 %v354, 0.5
    %v359 = vtanh.pop %v357
    %v360 = vtanh.pop %v358
    %v361 = vmul.f32 %v359, 0.5
    %v362 = vmul.f32 %v360, 0.5
    %v363 = vadd.f32 %v361, 0.5
    %v364 = vadd.f32 %v362, 0.5
    %v365 = vpack.c.bf16 %v364, %v363
    %366 = vst [vmem:[#allocation13] sm:$0xff] %v365
    // Predicated region
    $region50: #{tpu_custom_call.1} parent=1 // pred_check
      _
    $region51: #{tpu_custom_call.1} parent=1 // pred_check_branch
      %368 = sbr.rel (0) target = $region53
    $region52: #{tpu_custom_call.1} parent=1 // pred_region
      %370 = vsyncadd [#allocation6], 0
      %s372 = sshll.u32 [#allocation13], 4
      %s373 = int_to_ptr.vmem [resolvable:$true] %s372
      %s374 = sshll.u32 %s8, 4
      %s375 = int_to_ptr.hbm [resolvable:$true] %s374
      %377 = dma.vmem_to_hbm [thread:$0]  %s373, 128, %s375, [#allocation6]
    $region53: #{tpu_custom_call.1} parent=1 // pred_fallthru
      _
    // Predicated region
    $region54: #{tpu_custom_call.1} parent=1 // pred_check
      _
    $region55: #{tpu_custom_call.1} parent=1 // pred_check_branch
      %379 = sbr.rel (0) target = $region57
    $region56: #{tpu_custom_call.1} parent=1 // pred_region
      %381 = dma.done [#allocation6], 128
    $region57: #{tpu_custom_call.1} parent=1 // pred_fallthru
      _
    %382 = vsyncpa [#allocation5], 1
    %383 = vsyncpa [#allocation8], 1
    %384 = vsyncpa [#allocation11], 1
    %385 = vsyncpa [#allocation6], 1

// kernel: tpu_custom_call.1
$region0: #{tpu_custom_call.1}
  #allocation0 [shape = 'u32[]', space=smem, size = 0x4, offset = 0x4, fixed_abs, tag = 'smem constant byte address 0x4 - core index']
  #allocation1 [shape = 'u32[72,128]{1,0:T(1,128)}', space=vmem, size = 0x9000, scoped, tag = 'internal scratch']
  #allocation2 [shape = 's32[1]{0}', space=sflag, size = 0x4, scoped, tag = 'scoped memory for tpu_custom_call.1']
  #allocation3 [shape = 's32[1]{0:T(128)S(6)}', space=smem, size = 0x200, scoped, tag = 'prefetched SMEM operand 0']
  %s0 = inlined_call_operand.<no memory space> [shape: s32[1], index: 0, kind: input, shape index: {}]
  %s1 = inlined_call_operand.hbm [shape: f32[8,16], index: 1, kind: input, shape index: {}]
  %s2 = inlined_call_operand.hbm [shape: bf16[16,128], index: 2, kind: input, shape index: {}]
  %s3 = inlined_call_operand.vmem [shape: f32[1,128], index: 3, kind: input, shape index: {}]
  %s4 = inlined_call_operand.hbm [shape: bf16[128,128], index: 4, kind: input, shape index: {}]
  %s5 = inlined_call_operand.vmem [shape: f32[1,128], index: 5, kind: input, shape index: {}]
  %s6 = inlined_call_operand.hbm [shape: bf16[4,128,256], index: 6, kind: input, shape index: {}]
  %s7 = inlined_call_operand.hbm [shape: f32[4,1,256], index: 7, kind: input, shape index: {}]
  %s8 = inlined_call_operand.hbm [shape: bf16[8,256], index: 8, kind: output, shape index: {}]
  %s9 = sld [smem:[#allocation0]]
  $region58: #{tpu_custom_call.1} parent=0
    _
  %s11 = ssub.s32 1, %s9
  %s12 = scalar_select 0, %s11, %s9
  %13 = sst [smem:[#allocation3]] %s0
  $region1: #{tpu_custom_call.1} parent=0
    #allocation4 [shape = 'u8[4096]{0}', space=vmem, size = 0x1000, scoped, tag = 'input window, operand 1, single buffered']
    #allocation5 [shape = 's32[1]{0}', space=sflag, size = 0x4, scoped, tag = 'scoped memory for tpu_custom_call.1']
    #allocation6 [shape = 's32[1]{0}', space=sflag, size = 0x4, scoped, tag = 'scoped memory for tpu_custom_call.1']
    #allocation7 [shape = 'u8[4096]{0}', space=vmem, size = 0x1000, scoped, tag = 'input window, operand 2, single buffered']
    #allocation8 [shape = 's32[1]{0}', space=sflag, size = 0x4, scoped, tag = 'scoped memory for tpu_custom_call.1']
    #allocation9 [shape = 'u8[32768]{0}', space=vmem, size = 0x8000, scoped, tag = 'input window, operand 4, single buffered']
    #allocation10 [shape = 'u8[65536]{0}', space=vmem, size = 0x10000, scoped, tag = 'input window, operand 6, single buffered']
    #allocation11 [shape = 's32[1]{0}', space=sflag, size = 0x4, scoped, tag = 'scoped memory for tpu_custom_call.1']
    #allocation12 [shape = 'u8[1024]{0}', space=vmem, size = 0x400, scoped, tag = 'input window, operand 7, single buffered']
    #allocation13 [shape = 'u8[4096]{0}', space=vmem, size = 0x1000, scoped, tag = 'output window, operand 0, single buffered']
    %14 = vsyncpa [#allocation5], 0
    %15 = vsyncpa [#allocation8], 0
    %16 = vsyncpa [#allocation11], 0
    %17 = vsyncpa [#allocation6], 0
    // Predicated region
    $region2: #{tpu_custom_call.1} parent=1 // pred_check
      _
    $region3: #{tpu_custom_call.1} parent=1 // pred_check_branch
      %19 = sbr.rel (0) target = $region5
    $region4: #{tpu_custom_call.1} parent=1 // pred_region
      %21 = vsyncadd [#allocation5], 0
      %s23 = sshll.u32 %s1, 4
      %s24 = int_to_ptr.hbm [resolvable:$true] %s23
      %s25 = sshll.u32 [#allocation4], 4
      %s26 = int_to_ptr.vmem [resolvable:$true] %s25
      %28 = dma.hbm_to_vmem [thread:$0]  %s24, 128, %s26, [#allocation5]
    $region5: #{tpu_custom_call.1} parent=1 // pred_fallthru
      _
    // Predicated region
    $region6: #{tpu_custom_call.1} parent=1 // pred_check
      _
    $region7: #{tpu_custom_call.1} parent=1 // pred_check_branch
      %30 = sbr.rel (0) target = $region9
    $region8: #{tpu_custom_call.1} parent=1 // pred_region
      %32 = vsyncadd [#allocation8], 0
      %s33 = sshll.u32 %s2, 4
      %s34 = int_to_ptr.hbm [resolvable:$true] %s33
      %s35 = sshll.u32 [#allocation7], 4
      %s36 = int_to_ptr.vmem [resolvable:$true] %s35
      %41 = dma.hbm_to_vmem [thread:$0]  %s34, 128, %s36, [#allocation8], 64, 64, 4
    $region9: #{tpu_custom_call.1} parent=1 // pred_fallthru
      _
    // Predicated region
    $region10: #{tpu_custom_call.1} parent=1 // pred_check
      _
    $region11: #{tpu_custom_call.1} parent=1 // pred_check_branch
      %43 = sbr.rel (0) target = $region13
    $region12: #{tpu_custom_call.1} parent=1 // pred_region
      _
    $region13: #{tpu_custom_call.1} parent=1 // pred_fallthru
      _
    // Predicated region
    $region14: #{tpu_custom_call.1} parent=1 // pred_check
      _
    $region15: #{tpu_custom_call.1} parent=1 // pred_check_branch
      %45 = sbr.rel (0) target = $region17
    $region16: #{tpu_custom_call.1} parent=1 // pred_region
      %47 = vsyncadd [#allocation8], 0
      %s48 = sshll.u32 %s4, 4
      %s49 = int_to_ptr.hbm [resolvable:$true] %s48
      %s50 = sshll.u32 [#allocation9], 4
      %s51 = int_to_ptr.vmem [resolvable:$true] %s50
      %56 = dma.hbm_to_vmem [thread:$0]  %s49, 1024, %s51, [#allocation8], 64, 64, 4
    $region17: #{tpu_custom_call.1} parent=1 // pred_fallthru
      _
    // Predicated region
    $region18: #{tpu_custom_call.1} parent=1 // pred_check
      _
    $region19: #{tpu_custom_call.1} parent=1 // pred_check_branch
      %58 = sbr.rel (0) target = $region21
    $region20: #{tpu_custom_call.1} parent=1 // pred_region
      _
    $region21: #{tpu_custom_call.1} parent=1 // pred_fallthru
      _
    // Predicated region
    $region22: #{tpu_custom_call.1} parent=1 // pred_check
      _
    $region23: #{tpu_custom_call.1} parent=1 // pred_check_branch
      %60 = sbr.rel (0) target = $region25
    $region24: #{tpu_custom_call.1} parent=1 // pred_region
      %s61 = sld [smem:[#allocation3]]
      %63 = vsyncadd [#allocation11], 0
      %s64 = smul.addr %s61, 32
      %s65 = smul.addr %s64, 4
      %s66 = scalar_lea.hbm %s6, %s65
      %s67 = sshll.u32 %s66, 4
      %s68 = int_to_ptr.hbm [resolvable:$true] %s67
      %s69 = sshll.u32 [#allocation10], 4
      %s70 = int_to_ptr.vmem [resolvable:$true] %s69
      %75 = dma.hbm_to_vmem [thread:$0]  %s68, 2048, %s70, [#allocation11], 128, 128, 8
    $region25: #{tpu_custom_call.1} parent=1 // pred_fallthru
      _
    // Predicated region
    $region26: #{tpu_custom_call.1} parent=1 // pred_check
      _
    $region27: #{tpu_custom_call.1} parent=1 // pred_check_branch
      %77 = sbr.rel (0) target = $region29
    $region28: #{tpu_custom_call.1} parent=1 // pred_region
      %s78 = sld [smem:[#allocation3]]
      %80 = vsyncadd [#allocation11], 0
      %s81 = smul.addr %s78, 2
      %s82 = scalar_lea.hbm %s7, %s81
      %s84 = sshll.u32 %s82, 4
      %s85 = int_to_ptr.hbm [resolvable:$true] %s84
      %s86 = sshll.u32 [#allocation12], 4
      %s87 = int_to_ptr.vmem [resolvable:$true] %s86
      %89 = dma.hbm_to_vmem [thread:$0]  %s85, 32, %s87, [#allocation11]
    $region29: #{tpu_custom_call.1} parent=1 // pred_fallthru
      _
    // Predicated region
    $region30: #{tpu_custom_call.1} parent=1 // pred_check
      _
    $region31: #{tpu_custom_call.1} parent=1 // pred_check_branch
      %91 = sbr.rel (0) target = $region33
    $region32: #{tpu_custom_call.1} parent=1 // pred_region
      %93 = dma.done [#allocation5], 128
    $region33: #{tpu_custom_call.1} parent=1 // pred_fallthru
      _
    // Predicated region
    $region34: #{tpu_custom_call.1} parent=1 // pred_check
      _
    $region35: #{tpu_custom_call.1} parent=1 // pred_check_branch
      %95 = sbr.rel (0) target = $region37
    $region36: #{tpu_custom_call.1} parent=1 // pred_region
      %97 = dma.done [#allocation8], 128
    $region37: #{tpu_custom_call.1} parent=1 // pred_fallthru
      _
    // Predicated region
    $region38: #{tpu_custom_call.1} parent=1 // pred_check
      _
    $region39: #{tpu_custom_call.1} parent=1 // pred_check_branch
      %99 = sbr.rel (0) target = $region41
    $region40: #{tpu_custom_call.1} parent=1 // pred_region
      %101 = dma.done [#allocation8], 1024
    $region41: #{tpu_custom_call.1} parent=1 // pred_fallthru
      _
    // Predicated region
    $region42: #{tpu_custom_call.1} parent=1 // pred_check
      _
    $region43: #{tpu_custom_call.1} parent=1 // pred_check_branch
      %103 = sbr.rel (0) target = $region45
    $region44: #{tpu_custom_call.1} parent=1 // pred_region
      %105 = dma.done [#allocation11], 2048
    $region45: #{tpu_custom_call.1} parent=1 // pred_fallthru
      _
    // Predicated region
    $region46: #{tpu_custom_call.1} parent=1 // pred_check
      _
    $region47: #{tpu_custom_call.1} parent=1 // pred_check_branch
      %107 = sbr.rel (0) target = $region49
    $region48: #{tpu_custom_call.1} parent=1 // pred_region
      %109 = dma.done [#allocation11], 32
    $region49: #{tpu_custom_call.1} parent=1 // pred_fallthru
      _
    %s110 = sld [smem:[#allocation3]]
    %s111 = sld [smem:[#allocation3]]
    %v113 = vld [vmem:[#allocation4] sm:$0xff]
    %v114 = vpack.c.bf16 %v113, %v113
    %v115 = vld [vmem:[#allocation7] sm:$0xf]
    %v116 = vld [vmem:[#allocation7 + $0x4] sm:$0xf]
    %v117 = vld [vmem:[%s3] sm:$0x1]
    %v119 = vperm.slane %v117, 0
    %v123 = vunpack.c.l.b16 %v115
    %v124 = vunpack.c.l.b16 %v116
    %v125 = vpack.c.b16 %v124, %v123
    %vm127 = vcmask 130048
    %v129 = vsel %vm127, %v114, 0
    %131 = vmatpush.bf16.msra.mxu0 0
    %132 = vmatpush.bf16.msra.mxu0 0
    %133 = vmatpush.bf16.msra.mxu0 0
    %134 = vmatpush.bf16.msra.mxu0 0
    %135 = vmatpush.bf16.msra.mxu0 0
    %136 = vmatpush.bf16.msra.mxu0 0
    %137 = vmatpush.bf16.msra.mxu0 0
    %138 = vmatpush.bf16.msra.mxu0 %v125
    %139 = vmatmul.bf16.gmra.mxu0 %v129
    %v140 = vpop.f32.mrf.mxu0
    %v141 = vadd.f32 %v119, %v140
    %v142 = vpop.f32.mrf.mxu0
    %143 = vdwg.mxu0
    %v144 = vmax.f32 %v141, 0.0
    %v145 = vpack.c.bf16 %v144, %v144
    %v146 = vld [vmem:[#allocation9] sm:$0xf]
    %v147 = vld [vmem:[#allocation9 + $0x4] sm:$0xf]
    %v148 = vld [vmem:[#allocation9 + $0x8] sm:$0xf]
    %v149 = vld [vmem:[#allocation9 + $0xc] sm:$0xf]
    %v150 = vld [vmem:[#allocation9 + $0x10] sm:$0xf]
    %v151 = vld [vmem:[#allocation9 + $0x14] sm:$0xf]
    %v152 = vld [vmem:[#allocation9 + $0x18] sm:$0xf]
    %v153 = vld [vmem:[#allocation9 + $0x1c] sm:$0xf]
    %v154 = vld [vmem:[#allocation9 + $0x20] sm:$0xf]
    %v155 = vld [vmem:[#allocation9 + $0x24] sm:$0xf]
    %v156 = vld [vmem:[#allocation9 + $0x28] sm:$0xf]
    %v157 = vld [vmem:[#allocation9 + $0x2c] sm:$0xf]
    %v158 = vld [vmem:[#allocation9 + $0x30] sm:$0xf]
    %v159 = vld [vmem:[#allocation9 + $0x34] sm:$0xf]
    %v160 = vld [vmem:[#allocation9 + $0x38] sm:$0xf]
    %v161 = vld [vmem:[#allocation9 + $0x3c] sm:$0xf]
    %v162 = vld [vmem:[%s5] sm:$0x1]
    %v164 = vperm.slane %v162, 0
    %v182 = vunpack.c.l.b16 %v146
    %v183 = vunpack.c.l.b16 %v147
    %v184 = vunpack.c.l.b16 %v148
    %v185 = vunpack.c.l.b16 %v149
    %v186 = vunpack.c.l.b16 %v150
    %v187 = vunpack.c.l.b16 %v151
    %v188 = vunpack.c.l.b16 %v152
    %v189 = vunpack.c.l.b16 %v153
    %v190 = vunpack.c.l.b16 %v154
    %v191 = vunpack.c.l.b16 %v155
    %v192 = vunpack.c.l.b16 %v156
    %v193 = vunpack.c.l.b16 %v157
    %v194 = vunpack.c.l.b16 %v158
    %v195 = vunpack.c.l.b16 %v159
    %v196 = vunpack.c.l.b16 %v160
    %v197 = vunpack.c.l.b16 %v161
    %v198 = vpack.c.b16 %v183, %v182
    %v199 = vpack.c.b16 %v185, %v184
    %v200 = vpack.c.b16 %v187, %v186
    %v201 = vpack.c.b16 %v189, %v188
    %v202 = vpack.c.b16 %v191, %v190
    %v203 = vpack.c.b16 %v193, %v192
    %v204 = vpack.c.b16 %v195, %v194
    %v205 = vpack.c.b16 %v197, %v196
    %214 = vmatpush.bf16.msra.mxu0 %v205
    %215 = vmatpush.bf16.msra.mxu0 %v204
    %216 = vmatpush.bf16.msra.mxu0 %v203
    %217 = vmatpush.bf16.msra.mxu0 %v202
    %218 = vmatpush.bf16.msra.mxu0 %v201
    %219 = vmatpush.bf16.msra.mxu0 %v200
    %220 = vmatpush.bf16.msra.mxu0 %v199
    %221 = vmatpush.bf16.msra.mxu0 %v198
    %222 = vmatmul.bf16.gmra.mxu0 %v145
    %v223 = vpop.f32.mrf.mxu0
    %v224 = vadd.f32 %v164, %v223
    %v225 = vpop.f32.mrf.mxu0
    %226 = vdwg.mxu0
    %v227 = vmax.f32 %v224, 0.0
    %v228 = vpack.c.bf16 %v227, %v227
    %v229 = vld [vmem:[#allocation10] sm:$0xff]
    %v230 = vld [vmem:[#allocation10 + $0x8] sm:$0xff]
    %v231 = vld [vmem:[#allocation10 + $0x10] sm:$0xff]
    %v232 = vld [vmem:[#allocation10 + $0x18] sm:$0xff]
    %v233 = vld [vmem:[#allocation10 + $0x20] sm:$0xff]
    %v234 = vld [vmem:[#allocation10 + $0x28] sm:$0xff]
    %v235 = vld [vmem:[#allocation10 + $0x30] sm:$0xff]
    %v236 = vld [vmem:[#allocation10 + $0x38] sm:$0xff]
    %v237 = vld [vmem:[#allocation10 + $0x40] sm:$0xff]
    %v238 = vld [vmem:[#allocation10 + $0x48] sm:$0xff]
    %v239 = vld [vmem:[#allocation10 + $0x50] sm:$0xff]
    %v240 = vld [vmem:[#allocation10 + $0x58] sm:$0xff]
    %v241 = vld [vmem:[#allocation10 + $0x60] sm:$0xff]
    %v242 = vld [vmem:[#allocation10 + $0x68] sm:$0xff]
    %v243 = vld [vmem:[#allocation10 + $0x70] sm:$0xff]
    %v244 = vld [vmem:[#allocation10 + $0x78] sm:$0xff]
    %v245 = vld [vmem:[#allocation12] sm:$0x3]
    %v247 = vperm.slane %v245, 0
    %v248 = vperm.slane %v245, 1
    %v267 = vunpack.c.l.b16 %v229
    %v268 = vunpack.c.h.b16 %v229
    %v269 = vunpack.c.l.b16 %v230
    %v270 = vunpack.c.h.b16 %v230
    %v271 = vunpack.c.l.b16 %v231
    %v272 = vunpack.c.h.b16 %v231
    %v273 = vunpack.c.l.b16 %v232
    %v274 = vunpack.c.h.b16 %v232
    %v275 = vunpack.c.l.b16 %v233
    %v276 = vunpack.c.h.b16 %v233
    %v277 = vunpack.c.l.b16 %v234
    %v278 = vunpack.c.h.b16 %v234
    %v279 = vunpack.c.l.b16 %v235
    %v280 = vunpack.c.h.b16 %v235
    %v281 = vunpack.c.l.b16 %v236
    %v282 = vunpack.c.h.b16 %v236
    %v283 = vunpack.c.l.b16 %v237
    %v284 = vunpack.c.h.b16 %v237
    %v285 = vunpack.c.l.b16 %v238
    %v286 = vunpack.c.h.b16 %v238
    %v287 = vunpack.c.l.b16 %v239
    %v288 = vunpack.c.h.b16 %v239
    %v289 = vunpack.c.l.b16 %v240
    %v290 = vunpack.c.h.b16 %v240
    %v291 = vunpack.c.l.b16 %v241
    %v292 = vunpack.c.h.b16 %v241
    %v293 = vunpack.c.l.b16 %v242
    %v294 = vunpack.c.h.b16 %v242
    %v295 = vunpack.c.l.b16 %v243
    %v296 = vunpack.c.h.b16 %v243
    %v297 = vunpack.c.l.b16 %v244
    %v298 = vunpack.c.h.b16 %v244
    %v299 = vpack.c.b16 %v269, %v267
    %v300 = vpack.c.b16 %v270, %v268
    %v301 = vpack.c.b16 %v273, %v271
    %v302 = vpack.c.b16 %v274, %v272
    %v303 = vpack.c.b16 %v277, %v275
    %v304 = vpack.c.b16 %v278, %v276
    %v305 = vpack.c.b16 %v281, %v279
    %v306 = vpack.c.b16 %v282, %v280
    %v307 = vpack.c.b16 %v285, %v283
    %v308 = vpack.c.b16 %v286, %v284
    %v309 = vpack.c.b16 %v289, %v287
    %v310 = vpack.c.b16 %v290, %v288
    %v311 = vpack.c.b16 %v293, %v291
    %v312 = vpack.c.b16 %v294, %v292
    %v313 = vpack.c.b16 %v297, %v295
    %v314 = vpack.c.b16 %v298, %v296
    %331 = vmatpush.bf16.msra.mxu0 %v313
    %332 = vmatpush.bf16.msra.mxu0 %v311
    %333 = vmatpush.bf16.msra.mxu0 %v309
    %334 = vmatpush.bf16.msra.mxu0 %v307
    %335 = vmatpush.bf16.msra.mxu0 %v305
    %336 = vmatpush.bf16.msra.mxu0 %v303
    %337 = vmatpush.bf16.msra.mxu0 %v301
    %338 = vmatpush.bf16.msra.mxu0 %v299
    %339 = vmatmul.bf16.gmra.mxu0 %v228
    %v340 = vpop.f32.mrf.mxu0
    %v341 = vadd.f32 %v247, %v340
    %v342 = vpop.f32.mrf.mxu0
    %343 = vdwg.mxu0
    %344 = vmatpush.bf16.msra.mxu0 %v314
    %345 = vmatpush.bf16.msra.mxu0 %v312
    %346 = vmatpush.bf16.msra.mxu0 %v310
    %347 = vmatpush.bf16.msra.mxu0 %v308
    %348 = vmatpush.bf16.msra.mxu0 %v306
    %349 = vmatpush.bf16.msra.mxu0 %v304
    %350 = vmatpush.bf16.msra.mxu0 %v302
    %351 = vmatpush.bf16.msra.mxu0 %v300
    %352 = vmatmul.bf16.gmra.mxu0 %v228
    %v353 = vpop.f32.mrf.mxu0
    %v354 = vadd.f32 %v248, %v353
    %v355 = vpop.f32.mrf.mxu0
    %356 = vdwg.mxu0
    %v357 = vmul.f32 %v341, 0.5
    %v358 = vmul.f32 %v354, 0.5
    %v359 = vtanh.pop %v357
    %v360 = vtanh.pop %v358
    %v361 = vmul.f32 %v359, 0.5
    %v362 = vmul.f32 %v360, 0.5
    %v363 = vadd.f32 %v361, 0.5
    %v364 = vadd.f32 %v362, 0.5
    %v365 = vpack.c.bf16 %v364, %v363
    %366 = vst [vmem:[#allocation13] sm:$0xff] %v365
    // Predicated region
    $region50: #{tpu_custom_call.1} parent=1 // pred_check
      _
    $region51: #{tpu_custom_call.1} parent=1 // pred_check_branch
      %368 = sbr.rel (0) target = $region53
    $region52: #{tpu_custom_call.1} parent=1 // pred_region
      %370 = vsyncadd [#allocation6], 0
      %s372 = sshll.u32 [#allocation13], 4
      %s373 = int_to_ptr.vmem [resolvable:$true] %s372
      %s374 = sshll.u32 %s8, 4
      %s375 = int_to_ptr.hbm [resolvable:$true] %s374
      %377 = dma.vmem_to_hbm [thread:$0]  %s373, 128, %s375, [#allocation6]
    $region53: #{tpu_custom_call.1} parent=1 // pred_fallthru
      _
    // Predicated region
    $region54: #{tpu_custom_call.1} parent=1 // pred_check
      _
    $region55: #{tpu_custom_call.1} parent=1 // pred_check_branch
      %379 = sbr.rel (0) target = $region57
    $region56: #{tpu_custom_call.1} parent=1 // pred_region
      %381 = dma.done [#allocation6], 128
    $region57: #{tpu_custom_call.1} parent=1 // pred_fallthru
      _
    %382 = vsyncpa [#allocation5], 1
    %383 = vsyncpa [#allocation8], 1
    %384 = vsyncpa [#allocation11], 1
    %385 = vsyncpa [#allocation6], 1

</llo_original>
